<compile_context>
chip_gen: v7x
topology: tpu7x:2x2x1
jax: 0.10.0
libtpu: 0.0.40
codegen_flags: <defaults>
</compile_context>

<pallas_src>
import jax
import jax.numpy as jnp
from jax.experimental import pallas as pl
from jax.experimental.pallas import tpu as pltpu


_MXU_DTYPE = jnp.bfloat16   # MXU operand dtype; accumulation is always f32.


def _num_grid_slabs(E: int) -> int:
    """One grid step on single-TensorCore chips (v5e/v6e); split the packed
    ensemble columns across TensorCores on multi-core chips (v7x)."""
    n = 1
    try:
        kind = jax.devices()[0].device_kind.lower()
        if "v7" in kind or "7x" in kind:
            n = 2
    except Exception:  # defensive: never fatal, fall back to a single step
        n = 1
    while n > 1 and E % n != 0:
        n -= 1
    return n


def _pack_cols(w, G):
    """(E, din, dout) -> (G, din, (E//G)*dout); column block j_local of slab g
    holds the weights of ensemble member g*(E//G) + j_local."""
    E, din, dout = w.shape
    Eg = E // G
    return (w.reshape(G, Eg, din, dout)
             .transpose(0, 2, 1, 3)
             .reshape(G, din, Eg * dout))


def _pack_block_diag(w, G):
    """(E, din, dout) -> (G, (E//G)*din, (E//G)*dout) per-slab block-diagonal,
    block (j, j) of slab g = w[g*(E//G) + j]."""
    E, din, dout = w.shape
    Eg = E // G
    eye = jnp.eye(Eg, dtype=w.dtype)
    wg = w.reshape(G, Eg, din, dout)
    bd = jnp.einsum('gjrc,jk->gjrkc', wg, eye)      # (G, Eg, din, Eg, dout)
    return bd.reshape(G, Eg * din, Eg * dout)


def _make_kernel(n_mats: int, E: int, B: int, width_out: int):
    """One grid step: all layers, all E input slices, one ensemble column slab."""

    def kernel(*refs):
        s_ref, a_ref, w0s_ref, w0a_ref = refs[:4]
        w_refs = refs[4:4 + n_mats]
        out_ref = refs[4 + n_mats]                  # (2, B, Eg*Ds)

        # Layer 0: the (states, actions) concat is fused into two matmuls; all
        # ensemble column blocks of this slab come out of a single MXU push.
        h = (jnp.dot(s_ref[...], w0s_ref[...], preferred_element_type=jnp.float32)
             + jnp.dot(a_ref[...], w0a_ref[...], preferred_element_type=jnp.float32))

        # Hidden + output layers: block-diagonal packed weights keep ensemble
        # members independent while using one MXU push per layer.
        for k in range(n_mats):
            x = jnp.maximum(h, 0.01 * h)            # leaky_relu(0.01)
            h = jnp.dot(x.astype(_MXU_DTYPE), w_refs[k][...],
                        preferred_element_type=jnp.float32)

        # h: (E*B, Eg*Ds); row block i = input slice i, col block j = member j.
        y = h.reshape(E, B, width_out)

        # Two-pass mean / unbiased variance over the E input slices
        # (no catastrophic cancellation).
        mean = jnp.sum(y, axis=0) * (1.0 / E)
        dev = y - mean[None, :, :]
        var = jnp.sum(dev * dev, axis=0) * (1.0 / (E - 1))

        out_ref[0] = mean
        out_ref[1] = var

    return kernel


@jax.jit
def model_forward(states, actions, *weights):
    """states: (E, B, Ds) f32, actions: (E, B, Da) f32,
    weights[k]: (E, d_in_k, d_out_k) f32 with d_in_0 == Ds + Da.
    Returns (next_state_mean, var), each (E, B, Ds) f32.  Requires E >= 2."""
    E, B, Ds = states.shape
    Da = actions.shape[-1]
    if E < 2:
        raise ValueError("ensemble_size must be >= 2 (unbiased variance uses E-1).")

    G = _num_grid_slabs(E)                          # grid steps (column slabs)
    Eg = E // G

    # Pack the ensemble along the matmul N dimension (wrapper-side, one-off).
    # W0 is additionally split by input rows so the concat fuses into layer 0.
    w0 = weights[0].astype(_MXU_DTYPE)
    w0s_p = _pack_cols(w0[:, :Ds, :], G)            # (G, Ds, Eg*H)
    w0a_p = _pack_cols(w0[:, Ds:, :], G)            # (G, Da, Eg*H)
    w_rest_p = [_pack_block_diag(w.astype(_MXU_DTYPE), G) for w in weights[1:]]

    # Inputs pre-cast / pre-flattened once in the wrapper (no in-kernel cast).
    # B a multiple of 8 keeps the in-kernel (E*B, F)->(E, B, F) reshape a pure
    # relayout.
    s_flat = states.reshape(E * B, Ds).astype(_MXU_DTYPE)
    a_flat = actions.reshape(E * B, Da).astype(_MXU_DTYPE)

    width_out = Eg * Ds
    kernel = _make_kernel(len(w_rest_p), E, B, width_out)

    # Resident inputs: constant index_map -> DMA'd once.  Per-slab weights:
    # Squeezed leading dim -> only one slab's weights in VMEM per step, and the
    # pipeline can prefetch slab g+1 while computing slab g (v7x).
    in_specs = [
        pl.BlockSpec((E * B, Ds), lambda g: (0, 0)),
        pl.BlockSpec((E * B, Da), lambda g: (0, 0)),
        pl.BlockSpec((pl.Squeezed(),) + w0s_p.shape[1:], lambda g: (g, 0, 0)),
        pl.BlockSpec((pl.Squeezed(),) + w0a_p.shape[1:], lambda g: (g, 0, 0)),
    ]
    for w in w_rest_p:
        in_specs.append(
            pl.BlockSpec((pl.Squeezed(),) + w.shape[1:], lambda g: (g, 0, 0)))

    # Fused (mean, var) slab, lane-denser last dim Eg*Ds (instead of Ds).
    out_specs = pl.BlockSpec((pl.Squeezed(), 2, B, width_out),
                             lambda g: (g, 0, 0, 0))
    out_shape = jax.ShapeDtypeStruct((G, 2, B, width_out), jnp.float32)

    fused = pl.pallas_call(
        kernel,
        out_shape=out_shape,
        grid_spec=pltpu.PrefetchScalarGridSpec(
            num_scalar_prefetch=0,
            grid=(G,),
            in_specs=in_specs,
            out_specs=out_specs,
        ),
        compiler_params=pltpu.CompilerParams(
            dimension_semantics=("parallel",),      # megacore-shard slabs on v7x
        ),
    )(s_flat, a_flat, w0s_p, w0a_p, *w_rest_p)

    # Wrapper-side layout plumbing: unpack (g, b, j_local, d) -> (j, b, d) and
    # add the residual in f32 (original states, not the bf16 matmul copy).
    def unpack(slab):
        return (slab.reshape(G, B, Eg, Ds)
                    .transpose(0, 2, 1, 3)
                    .reshape(E, B, Ds))

    delta_mean = unpack(fused[:, 0])
    var = unpack(fused[:, 1])
    return delta_mean + states, var


def _reference(states, actions, weights):
    """Pure-JAX reference mirroring the PyTorch forward (normalizer=None), with
    the same bf16-operand / f32-accumulate matmul numerics as the kernel, but
    computed per ensemble member (no N-packing) to validate the packing."""
    E, B, Ds = states.shape
    bf = _MXU_DTYPE
    w0 = weights[0].astype(bf)
    w0s = w0[:, :Ds, :]
    w0a = w0[:, Ds:, :]
    w_rest = [w.astype(bf) for w in weights[1:]]

    def eval_f(j, s, a):
        h = (jnp.dot(s.astype(bf), w0s[j], preferred_element_type=jnp.float32)
             + jnp.dot(a.astype(bf), w0a[j], preferred_element_type=jnp.float32))
        for w in w_rest:
            x = jnp.where(h > 0, h, 0.01 * h)       # leaky_relu(0.01)
            h = jnp.dot(x.astype(bf), w[j], preferred_element_type=jnp.float32)
        return h

    preds = jnp.stack([
        jnp.stack([eval_f(j, states[i], actions[i]) for j in range(E)])
        for i in range(E)
    ])                                              # (i, j, B, Ds)
    delta_mean = preds.mean(0)
    var = preds.var(0, ddof=1)
    return delta_mean + states, var


if __name__ == "__main__":
    # Small, module-consistent shapes.
    ensemble_size = 4
    batch = 8
    d_state = 6
    d_action = 4
    n_hidden = 32
    n_layers = 3

    key = jax.random.PRNGKey(0)
    keys = jax.random.split(key, 2 + n_layers + 1)
    k_s, k_a, k_w = keys[0], keys[1], keys[2:]

    states = jax.random.normal(k_s, (ensemble_size, batch, d_state), jnp.float32)
    actions = jax.random.normal(k_a, (ensemble_size, batch, d_action), jnp.float32)

    # Deterministic "hypergan-generated" ensemble weights:
    #   W0: (E, Ds+Da, H), W1..W_{n-1}: (E, H, H), W_n: (E, H, Ds)
    dims = [d_state + d_action] + [n_hidden] * n_layers + [d_state]
    weights = []
    for li in range(len(dims) - 1):
        scale = 1.0 / jnp.sqrt(jnp.float32(dims[li]))
        w = scale * jax.random.normal(
            k_w[li], (ensemble_size, dims[li], dims[li + 1]), jnp.float32)
        weights.append(w)

    next_state_mean, var = model_forward(states, actions, *weights)
    jax.block_until_ready((next_state_mean, var))

    ref_mean, ref_var = _reference(states, actions, weights)
    assert next_state_mean.shape == (ensemble_size, batch, d_state)
    assert var.shape == (ensemble_size, batch, d_state)
    assert jnp.allclose(next_state_mean, ref_mean, rtol=1e-2, atol=1e-3), (
        float(jnp.max(jnp.abs(next_state_mean - ref_mean))))
    assert jnp.allclose(var, ref_var, rtol=1e-2, atol=1e-3), (
        float(jnp.max(jnp.abs(var - ref_var))))

    print("KERNEL_OK")
</pallas_src>

<mosaic_0001>
module attributes {stable_mosaic.version = 11 : i64} {
  func.func @kernel(%arg0: i32, %arg1: memref<32x6xbf16, #tpu.memory_space<vmem>>, %arg2: memref<32x4xbf16, #tpu.memory_space<vmem>>, %arg3: memref<1x6x128xbf16, #tpu.memory_space<vmem>>, %arg4: memref<1x4x128xbf16, #tpu.memory_space<vmem>>, %arg5: memref<1x128x128xbf16, #tpu.memory_space<vmem>>, %arg6: memref<1x128x128xbf16, #tpu.memory_space<vmem>>, %arg7: memref<1x128x24xbf16, #tpu.memory_space<vmem>>, %arg8: memref<1x2x8x24xf32, #tpu.memory_space<vmem>>) attributes {dimension_semantics = [#tpu.dimension_semantics<parallel>], iteration_bounds = array<i64: 1>, scalar_prefetch = 0 : i64, scratch_operands = 0 : i64, tpu.core_type = #tpu.core_type<tc>, window_params = [{pipeline_mode = #tpu.pipeline_mode<synchronous>, transform_indices = @transform_0, window_bounds = array<i64: 32, 6>}, {pipeline_mode = #tpu.pipeline_mode<synchronous>, transform_indices = @transform_1, window_bounds = array<i64: 32, 4>}, {transform_indices = @transform_2, window_bounds = array<i64: 1, 6, 128>}, {transform_indices = @transform_3, window_bounds = array<i64: 1, 4, 128>}, {transform_indices = @transform_4, window_bounds = array<i64: 1, 128, 128>}, {transform_indices = @transform_5, window_bounds = array<i64: 1, 128, 128>}, {transform_indices = @transform_6, window_bounds = array<i64: 1, 128, 24>}, {transform_indices = @transform_7, window_bounds = array<i64: 1, 2, 8, 24>}]} {
    %c0 = arith.constant 0 : index
    %c0_0 = arith.constant 0 : index
    %0 = vector.load %arg1[%c0, %c0_0] : memref<32x6xbf16, #tpu.memory_space<vmem>>, vector<32x6xbf16>
    %c0_1 = arith.constant 0 : index
    %c0_2 = arith.constant 0 : index
    %c0_3 = arith.constant 0 : index
    %1 = vector.load %arg3[%c0_1, %c0_2, %c0_3] : memref<1x6x128xbf16, #tpu.memory_space<vmem>>, vector<1x6x128xbf16>
    %2 = vector.shape_cast %1 : vector<1x6x128xbf16> to vector<6x128xbf16>
    %cst = arith.constant dense<0.000000e+00> : vector<32x128xf32>
    %3 = tpu.matmul %0, %2, %cst {dimension_numbers = #tpu.dot_dimension_numbers<[1], [0], [0], [1], [0, 0, 1, 1], [], []>} : vector<32x6xbf16>, vector<6x128xbf16>, vector<32x128xf32> -> vector<32x128xf32>
    %c0_4 = arith.constant 0 : index
    %c0_5 = arith.constant 0 : index
    %4 = vector.load %arg2[%c0_4, %c0_5] : memref<32x4xbf16, #tpu.memory_space<vmem>>, vector<32x4xbf16>
    %c0_6 = arith.constant 0 : index
    %c0_7 = arith.constant 0 : index
    %c0_8 = arith.constant 0 : index
    %5 = vector.load %arg4[%c0_6, %c0_7, %c0_8] : memref<1x4x128xbf16, #tpu.memory_space<vmem>>, vector<1x4x128xbf16>
    %6 = vector.shape_cast %5 : vector<1x4x128xbf16> to vector<4x128xbf16>
    %cst_9 = arith.constant dense<0.000000e+00> : vector<32x128xf32>
    %7 = tpu.matmul %4, %6, %cst_9 {dimension_numbers = #tpu.dot_dimension_numbers<[1], [0], [0], [1], [0, 0, 1, 1], [], []>} : vector<32x4xbf16>, vector<4x128xbf16>, vector<32x128xf32> -> vector<32x128xf32>
    %8 = arith.addf %3, %7 : vector<32x128xf32>
    %cst_10 = arith.constant 0.00999999977 : f32
    %9 = vector.broadcast %cst_10 : f32 to vector<32x128xf32>
    %10 = arith.mulf %9, %8 : vector<32x128xf32>
    %11 = arith.maximumf %8, %10 : vector<32x128xf32>
    %12 = arith.truncf %11 : vector<32x128xf32> to vector<32x128xbf16>
    %c0_11 = arith.constant 0 : index
    %c0_12 = arith.constant 0 : index
    %c0_13 = arith.constant 0 : index
    %13 = vector.load %arg5[%c0_11, %c0_12, %c0_13] : memref<1x128x128xbf16, #tpu.memory_space<vmem>>, vector<1x128x128xbf16>
    %14 = vector.shape_cast %13 : vector<1x128x128xbf16> to vector<128x128xbf16>
    %cst_14 = arith.constant dense<0.000000e+00> : vector<32x128xf32>
    %15 = tpu.matmul %12, %14, %cst_14 {dimension_numbers = #tpu.dot_dimension_numbers<[1], [0], [0], [1], [0, 0, 1, 1], [], []>} : vector<32x128xbf16>, vector<128x128xbf16>, vector<32x128xf32> -> vector<32x128xf32>
    %cst_15 = arith.constant 0.00999999977 : f32
    %16 = vector.broadcast %cst_15 : f32 to vector<32x128xf32>
    %17 = arith.mulf %16, %15 : vector<32x128xf32>
    %18 = arith.maximumf %15, %17 : vector<32x128xf32>
    %19 = arith.truncf %18 : vector<32x128xf32> to vector<32x128xbf16>
    %c0_16 = arith.constant 0 : index
    %c0_17 = arith.constant 0 : index
    %c0_18 = arith.constant 0 : index
    %20 = vector.load %arg6[%c0_16, %c0_17, %c0_18] : memref<1x128x128xbf16, #tpu.memory_space<vmem>>, vector<1x128x128xbf16>
    %21 = vector.shape_cast %20 : vector<1x128x128xbf16> to vector<128x128xbf16>
    %cst_19 = arith.constant dense<0.000000e+00> : vector<32x128xf32>
    %22 = tpu.matmul %19, %21, %cst_19 {dimension_numbers = #tpu.dot_dimension_numbers<[1], [0], [0], [1], [0, 0, 1, 1], [], []>} : vector<32x128xbf16>, vector<128x128xbf16>, vector<32x128xf32> -> vector<32x128xf32>
    %cst_20 = arith.constant 0.00999999977 : f32
    %23 = vector.broadcast %cst_20 : f32 to vector<32x128xf32>
    %24 = arith.mulf %23, %22 : vector<32x128xf32>
    %25 = arith.maximumf %22, %24 : vector<32x128xf32>
    %26 = arith.truncf %25 : vector<32x128xf32> to vector<32x128xbf16>
    %c0_21 = arith.constant 0 : index
    %c0_22 = arith.constant 0 : index
    %c0_23 = arith.constant 0 : index
    %27 = vector.load %arg7[%c0_21, %c0_22, %c0_23] : memref<1x128x24xbf16, #tpu.memory_space<vmem>>, vector<1x128x24xbf16>
    %28 = vector.shape_cast %27 : vector<1x128x24xbf16> to vector<128x24xbf16>
    %cst_24 = arith.constant dense<0.000000e+00> : vector<32x24xf32>
    %29 = tpu.matmul %26, %28, %cst_24 {dimension_numbers = #tpu.dot_dimension_numbers<[1], [0], [0], [1], [0, 0, 1, 1], [], []>} : vector<32x128xbf16>, vector<128x24xbf16>, vector<32x24xf32> -> vector<32x24xf32>
    %30 = vector.shape_cast %29 : vector<32x24xf32> to vector<4x8x24xf32>
    %cst_25 = arith.constant dense<0.000000e+00> : vector<8x24xf32>
    %31 = vector.multi_reduction <add>, %30, %cst_25 [0] : vector<4x8x24xf32> to vector<8x24xf32>
    %cst_26 = arith.constant 2.500000e-01 : f32
    %32 = vector.broadcast %cst_26 : f32 to vector<8x24xf32>
    %33 = arith.mulf %31, %32 : vector<8x24xf32>
    %34 = vector.shape_cast %33 : vector<8x24xf32> to vector<1x8x24xf32>
    %35 = vector.broadcast %34 : vector<1x8x24xf32> to vector<4x8x24xf32>
    %36 = arith.subf %30, %35 : vector<4x8x24xf32>
    %37 = arith.mulf %36, %36 : vector<4x8x24xf32>
    %cst_27 = arith.constant dense<0.000000e+00> : vector<8x24xf32>
    %38 = vector.multi_reduction <add>, %37, %cst_27 [0] : vector<4x8x24xf32> to vector<8x24xf32>
    %cst_28 = arith.constant 0.333333343 : f32
    %39 = vector.broadcast %cst_28 : f32 to vector<8x24xf32>
    %40 = arith.mulf %38, %39 : vector<8x24xf32>
    %c0_29 = arith.constant 0 : index
    %c0_30 = arith.constant 0 : index
    %c0_31 = arith.constant 0 : index
    %c0_32 = arith.constant 0 : index
    %41 = vector.load %arg8[%c0_29, %c0_30, %c0_31, %c0_32] : memref<1x2x8x24xf32, #tpu.memory_space<vmem>>, vector<1x1x8x24xf32>
    %42 = vector.shape_cast %41 : vector<1x1x8x24xf32> to vector<8x24xf32>
    %43 = vector.shape_cast %33 : vector<8x24xf32> to vector<1x1x8x24xf32>
    tpu.vector_store %arg8[%c0_29, %c0_30, %c0_31, %c0_32], %43 {strides = array<i32>} : memref<1x2x8x24xf32, #tpu.memory_space<vmem>>, vector<1x1x8x24xf32>,
    %c0_33 = arith.constant 0 : index
    %c1 = arith.constant 1 : index
    %c0_34 = arith.constant 0 : index
    %c0_35 = arith.constant 0 : index
    %44 = vector.load %arg8[%c0_33, %c1, %c0_34, %c0_35] : memref<1x2x8x24xf32, #tpu.memory_space<vmem>>, vector<1x1x8x24xf32>
    %45 = vector.shape_cast %44 : vector<1x1x8x24xf32> to vector<8x24xf32>
    %46 = vector.shape_cast %40 : vector<8x24xf32> to vector<1x1x8x24xf32>
    tpu.vector_store %arg8[%c0_33, %c1, %c0_34, %c0_35], %46 {strides = array<i32>} : memref<1x2x8x24xf32, #tpu.memory_space<vmem>>, vector<1x1x8x24xf32>,
    return
  }
  func.func @transform_0(%arg0: i32) -> (i32, i32) {
    %c0_i32 = arith.constant 0 : i32
    %c0_i32_0 = arith.constant 0 : i32
    %c0_i32_1 = arith.constant 0 : i32
    return %c0_i32, %c0_i32_0 : i32, i32
  }
  func.func @transform_1(%arg0: i32) -> (i32, i32) {
    %c0_i32 = arith.constant 0 : i32
    %c0_i32_0 = arith.constant 0 : i32
    %c0_i32_1 = arith.constant 0 : i32
    return %c0_i32, %c0_i32_0 : i32, i32
  }
  func.func @transform_2(%arg0: i32) -> (i32, i32, i32) {
    %c0_i32 = arith.constant 0 : i32
    %c0_i32_0 = arith.constant 0 : i32
    %c0_i32_1 = arith.constant 0 : i32
    return %arg0, %c0_i32, %c0_i32_0 : i32, i32, i32
  }
  func.func @transform_3(%arg0: i32) -> (i32, i32, i32) {
    %c0_i32 = arith.constant 0 : i32
    %c0_i32_0 = arith.constant 0 : i32
    %c0_i32_1 = arith.constant 0 : i32
    return %arg0, %c0_i32, %c0_i32_0 : i32, i32, i32
  }
  func.func @transform_4(%arg0: i32) -> (i32, i32, i32) {
    %c0_i32 = arith.constant 0 : i32
    %c0_i32_0 = arith.constant 0 : i32
    %c0_i32_1 = arith.constant 0 : i32
    return %arg0, %c0_i32, %c0_i32_0 : i32, i32, i32
  }
  func.func @transform_5(%arg0: i32) -> (i32, i32, i32) {
    %c0_i32 = arith.constant 0 : i32
    %c0_i32_0 = arith.constant 0 : i32
    %c0_i32_1 = arith.constant 0 : i32
    return %arg0, %c0_i32, %c0_i32_0 : i32, i32, i32
  }
  func.func @transform_6(%arg0: i32) -> (i32, i32, i32) {
    %c0_i32 = arith.constant 0 : i32
    %c0_i32_0 = arith.constant 0 : i32
    %c0_i32_1 = arith.constant 0 : i32
    return %arg0, %c0_i32, %c0_i32_0 : i32, i32, i32
  }
  func.func @transform_7(%arg0: i32) -> (i32, i32, i32, i32) {
    %c0_i32 = arith.constant 0 : i32
    %c0_i32_0 = arith.constant 0 : i32
    %c0_i32_1 = arith.constant 0 : i32
    %c0_i32_2 = arith.constant 0 : i32
    return %arg0, %c0_i32, %c0_i32_0, %c0_i32_1 : i32, i32, i32, i32
  }
}

</mosaic_0001>

<llo_original>
// kernel: squeeze.2
$region0: #{squeeze.2}
  %s0 = inlined_call_operand.vmem [shape: f32[1,1,8,24], index: 0, kind: input, shape index: {}]
  %s1 = inlined_call_operand.vmem [shape: f32[1,8,4,6], index: 1, kind: output, shape index: {}]
  $region1: #{squeeze.2} parent=0
    #allocation0 [shape = 'u8[32768]{0}', space=vmem, size = 0x8000, scoped, tag = 'scoped mem for output reshape']
    %v2 = vld [vmem:[%s0] sm:$0xff]
    %vm3 = vcmask 48128
    %4 = vst.msk [vmem:[#allocation0] ss:$8 sm:$0xf] %vm3, %v2
    %5 = vst.msk [vmem:[#allocation0] ss:$8 sm:$0xf0] %vm3, %v2
    %v6 = vld [vmem:[%s0] sm:$0xff]
    %7 = vrot.lane.b32.xlu0 %v6, 122
    %v8 = vpop.permute.xlu0 %7
    %vm9 = vcmask 48128
    %s10 = scalar_lea.vmem [#allocation0], 1
    %11 = vst.msk [vmem:[%s10] ss:$8 sm:$0xf] %vm9, %v8
    %s12 = scalar_lea.vmem [#allocation0], 1
    %13 = vst.msk [vmem:[%s12] ss:$8 sm:$0xf0] %vm9, %v8
    %v14 = vld [vmem:[%s0] sm:$0xff]
    %15 = vrot.lane.b32.xlu0 %v14, 116
    %v16 = vpop.permute.xlu0 %15
    %vm17 = vcmask 48128
    %s18 = scalar_lea.vmem [#allocation0], 2
    %19 = vst.msk [vmem:[%s18] ss:$8 sm:$0xf] %vm17, %v16
    %s20 = scalar_lea.vmem [#allocation0], 2
    %21 = vst.msk [vmem:[%s20] ss:$8 sm:$0xf0] %vm17, %v16
    %v22 = vld [vmem:[%s0] sm:$0xff]
    %23 = vrot.lane.b32.xlu0 %v22, 110
    %v24 = vpop.permute.xlu0 %23
    %vm25 = vcmask 48128
    %s26 = scalar_lea.vmem [#allocation0], 3
    %27 = vst.msk [vmem:[%s26] ss:$8 sm:$0xf] %vm25, %v24
    %s28 = scalar_lea.vmem [#allocation0], 3
    %29 = vst.msk [vmem:[%s28] ss:$8 sm:$0xf0] %vm25, %v24
    %s31 = sshllo.u32 0, 4
    %v33 = vld [vmem:[#allocation0] sm:%s31]
    %s34 = sshllo.u32 0, 4
    %35 = vst [vmem:[%s1] sm:%s34] %v33
    %s36 = scalar_lea.vmem [#allocation0], 8
    %v37 = vld [vmem:[%s36] sm:%s31]
    %s38 = sshllo.u32 0, 4
    %s39 = scalar_lea.vmem %s1, 4
    %40 = vst [vmem:[%s39] sm:%s38] %v37
    %s41 = scalar_lea.vmem [#allocation0], 16
    %v42 = vld [vmem:[%s41] sm:%s31]
    %s43 = sshllo.u32 0, 4
    %s44 = smul.addr 4, 2
    %s45 = scalar_lea.vmem %s1, %s44
    %46 = vst [vmem:[%s45] sm:%s43] %v42
    %s47 = scalar_lea.vmem [#allocation0], 24
    %v48 = vld [vmem:[%s47] sm:%s31]
    %s49 = sshllo.u32 0, 4
    %s50 = smul.addr 4, 3
    %s51 = scalar_lea.vmem %s1, %s50
    %52 = vst [vmem:[%s51] sm:%s49] %v48
    %s53 = scalar_lea.vmem [#allocation0], 32
    %v54 = vld [vmem:[%s53] sm:%s31]
    %s55 = sshllo.u32 0, 4
    %s56 = smul.addr 4, 4
    %s57 = scalar_lea.vmem %s1, %s56
    %58 = vst [vmem:[%s57] sm:%s55] %v54
    %s59 = scalar_lea.vmem [#allocation0], 40
    %v60 = vld [vmem:[%s59] sm:%s31]
    %s61 = sshllo.u32 0, 4
    %s62 = smul.addr 4, 5
    %s63 = scalar_lea.vmem %s1, %s62
    %64 = vst [vmem:[%s63] sm:%s61] %v60
    %s65 = scalar_lea.vmem [#allocation0], 48
    %v66 = vld [vmem:[%s65] sm:%s31]
    %s67 = sshllo.u32 0, 4
    %s68 = smul.addr 4, 6
    %s69 = scalar_lea.vmem %s1, %s68
    %70 = vst [vmem:[%s69] sm:%s67] %v66
    %s71 = scalar_lea.vmem [#allocation0], 56
    %v72 = vld [vmem:[%s71] sm:%s31]
    %s73 = sshllo.u32 0, 4
    %s74 = smul.addr 4, 7
    %s75 = scalar_lea.vmem %s1, %s74
    %76 = vst [vmem:[%s75] sm:%s73] %v72

// kernel: model_forward.1
$region0: #{model_forward.1}
  #allocation0 [shape = 'u32[]', space=smem, size = 0x4, offset = 0x4, fixed_abs, tag = 'smem constant byte address 0x4 - core index']
  #allocation1 [shape = 'u32[144,128]{1,0:T(1,128)}', space=vmem, size = 0x12000, scoped, tag = 'internal scratch']
  %s0 = inlined_call_operand.vmem [shape: bf16[32,6], index: 0, kind: input, shape index: {}]
  %s1 = inlined_call_operand.vmem [shape: bf16[32,4], index: 1, kind: input, shape index: {}]
  %s2 = inlined_call_operand.vmem [shape: bf16[1,6,128], index: 2, kind: input, shape index: {}]
  %s3 = inlined_call_operand.vmem [shape: bf16[1,4,128], index: 3, kind: input, shape index: {}]
  %s4 = inlined_call_operand.vmem [shape: bf16[1,128,128], index: 4, kind: input, shape index: {}]
  %s5 = inlined_call_operand.vmem [shape: bf16[1,128,128], index: 5, kind: input, shape index: {}]
  %s6 = inlined_call_operand.vmem [shape: bf16[1,128,24], index: 6, kind: input, shape index: {}]
  %s7 = inlined_call_operand.vmem [shape: f32[1,2,8,24], index: 7, kind: output, shape index: {}]
  %s8 = sld [smem:[#allocation0]]
  $region38: #{model_forward.1} parent=0
    _
  %s10 = ssub.s32 1, %s8
  %s11 = scalar_select 0, %s10, %s8
  // Predicated region
  $region2: #{model_forward.1} parent=0 // pred_check
    _
  $region3: #{model_forward.1} parent=0 // pred_check_branch
    %13 = sbr.rel (0) target = $region5
  $region4: #{model_forward.1} parent=0 // pred_region
    _
  $region5: #{model_forward.1} parent=0 // pred_fallthru
    _
  // Predicated region
  $region6: #{model_forward.1} parent=0 // pred_check
    _
  $region7: #{model_forward.1} parent=0 // pred_check_branch
    %15 = sbr.rel (0) target = $region9
  $region8: #{model_forward.1} parent=0 // pred_region
    _
  $region9: #{model_forward.1} parent=0 // pred_fallthru
    _
  // Predicated region
  $region10: #{model_forward.1} parent=0 // pred_check
    _
  $region11: #{model_forward.1} parent=0 // pred_check_branch
    %17 = sbr.rel (0) target = $region13
  $region12: #{model_forward.1} parent=0 // pred_region
    _
  $region13: #{model_forward.1} parent=0 // pred_fallthru
    _
  // Predicated region
  $region14: #{model_forward.1} parent=0 // pred_check
    _
  $region15: #{model_forward.1} parent=0 // pred_check_branch
    %19 = sbr.rel (0) target = $region17
  $region16: #{model_forward.1} parent=0 // pred_region
    _
  $region17: #{model_forward.1} parent=0 // pred_fallthru
    _
  // Predicated region
  $region18: #{model_forward.1} parent=0 // pred_check
    _
  $region19: #{model_forward.1} parent=0 // pred_check_branch
    %21 = sbr.rel (0) target = $region21
  $region20: #{model_forward.1} parent=0 // pred_region
    _
  $region21: #{model_forward.1} parent=0 // pred_fallthru
    _
  // Predicated region
  $region22: #{model_forward.1} parent=0 // pred_check
    _
  $region23: #{model_forward.1} parent=0 // pred_check_branch
    %23 = sbr.rel (0) target = $region25
  $region24: #{model_forward.1} parent=0 // pred_region
    _
  $region25: #{model_forward.1} parent=0 // pred_fallthru
    _
  // Predicated region
  $region26: #{model_forward.1} parent=0 // pred_check
    _
  $region27: #{model_forward.1} parent=0 // pred_check_branch
    %25 = sbr.rel (0) target = $region29
  $region28: #{model_forward.1} parent=0 // pred_region
    _
  $region29: #{model_forward.1} parent=0 // pred_fallthru
    _
  %v27 = vld [vmem:[%s0] sm:$0xf]
  %v28 = vld [vmem:[%s0 + $0x4] sm:$0xf]
  %v29 = vld [vmem:[%s0 + $0x8] sm:$0xf]
  %v30 = vld [vmem:[%s0 + $0xc] sm:$0xf]
  %v31 = vld [vmem:[%s2] sm:$0x7]
  %v32 = vld [vmem:[%s1] sm:$0xf]
  %v33 = vld [vmem:[%s1 + $0x4] sm:$0xf]
  %v34 = vld [vmem:[%s1 + $0x8] sm:$0xf]
  %v35 = vld [vmem:[%s1 + $0xc] sm:$0xf]
  %v36 = vld [vmem:[%s3] sm:$0x3]
  %v41 = vunpack.c.l.b16 %v32
  %v42 = vunpack.c.l.b16 %v33
  %v43 = vunpack.c.l.b16 %v34
  %v44 = vunpack.c.l.b16 %v35
  %v45 = vpack.c.b16 %v42, %v41
  %v46 = vpack.c.b16 %v44, %v43
  %vm47 = vcmask 31744
  %v49 = vsel %vm47, %v45, 0
  %v52 = vsel %vm47, %v46, 0
  %vm54 = vcmask 1041408
  %v56 = vsel %vm54, %v36, 0
  %58 = vmatprep.subr.bf16.mxu0 0
  %59 = vmatpush1.bf16.msra.mxu0 %v56
  %60 = vmatprep.subr.bf16.mxu0 0
  %61 = vmatpush1.bf16.msra.mxu0 0
  %62 = vmatprep.subr.bf16.mxu0 0
  %63 = vmatpush1.bf16.msra.mxu0 0
  %64 = vmatprep.subr.bf16.mxu0 0
  %65 = vmatpush1.bf16.msra.mxu0 0
  %66 = vmatprep.subr.bf16.mxu0 0
  %67 = vmatpush1.bf16.msra.mxu0 0
  %68 = vmatprep.subr.bf16.mxu0 0
  %69 = vmatpush1.bf16.msra.mxu0 0
  %70 = vmatprep.subr.bf16.mxu0 0
  %71 = vmatpush1.bf16.msra.mxu0 0
  %72 = vmatprep.subr.bf16.mxu0 0
  %73 = vmatpush1.bf16.msra.mxu0 0
  %74 = vmatprep.subr.bf16.mxu0 0
  %75 = vmatpush1.bf16.msra.mxu0 0
  %76 = vmatprep.subr.bf16.mxu0 0
  %77 = vmatpush1.bf16.msra.mxu0 0
  %78 = vmatprep.subr.bf16.mxu0 0
  %79 = vmatpush1.bf16.msra.mxu0 0
  %80 = vmatprep.subr.bf16.mxu0 0
  %81 = vmatpush1.bf16.msra.mxu0 0
  %82 = vmatprep.subr.bf16.mxu0 0
  %83 = vmatpush1.bf16.msra.mxu0 0
  %84 = vmatprep.subr.bf16.mxu0 0
  %85 = vmatpush1.bf16.msra.mxu0 0
  %86 = vmatprep.subr.bf16.mxu0 0
  %87 = vmatpush1.bf16.msra.mxu0 0
  %88 = vmatprep.subr.bf16.mxu0 0
  %89 = vmatpush1.bf16.msra.mxu0 0
  %90 = vmatprep.mubr.bf16.mxu0 0
  %91 = vmatmul.mubr.bf16.gmra.mrb[0].mxu0 %v49
  %v92 = vpop.f32.mrb[0].mxu0
  %v93 = vadd.f32 0.0, %v92
  %v94 = vpop.f32.mrb[0].mxu0
  %v95 = vpop.f32.mrb[0].mxu0
  %v96 = vadd.f32 0.0, %v95
  %v97 = vpop.f32.mrb[0].mxu0
  %98 = vmatprep.mubr.bf16.mxu0 0
  %99 = vmatmul.mubr.bf16.gmra.mrb[0].mxu0 %v52
  %v100 = vpop.f32.mrb[0].mxu0
  %v101 = vadd.f32 0.0, %v100
  %v102 = vpop.f32.mrb[0].mxu0
  %v103 = vpop.f32.mrb[0].mxu0
  %v104 = vadd.f32 0.0, %v103
  %v105 = vpop.f32.mrb[0].mxu0
  %106 = vdwg.mxu0
  %v111 = vunpack.c.l.b16 %v27
  %v112 = vunpack.c.l.b16 %v28
  %v113 = vunpack.c.l.b16 %v29
  %v114 = vunpack.c.l.b16 %v30
  %v115 = vpack.c.b16 %v112, %v111
  %v116 = vpack.c.b16 %v114, %v113
  %vm117 = vcmask 48128
  %v119 = vsel %vm117, %v115, 0
  %v122 = vsel %vm117, %v116, 0
  %vm124 = vcmask 1042432
  %v126 = vsel %vm124, %v31, 0
  %128 = vmatprep.subr.bf16.mxu0 0
  %129 = vmatpush1.bf16.msra.mxu0 %v126
  %130 = vmatprep.subr.bf16.mxu0 0
  %131 = vmatpush1.bf16.msra.mxu0 0
  %132 = vmatprep.subr.bf16.mxu0 0
  %133 = vmatpush1.bf16.msra.mxu0 0
  %134 = vmatprep.subr.bf16.mxu0 0
  %135 = vmatpush1.bf16.msra.mxu0 0
  %136 = vmatprep.subr.bf16.mxu0 0
  %137 = vmatpush1.bf16.msra.mxu0 0
  %138 = vmatprep.subr.bf16.mxu0 0
  %139 = vmatpush1.bf16.msra.mxu0 0
  %140 = vmatprep.subr.bf16.mxu0 0
  %141 = vmatpush1.bf16.msra.mxu0 0
  %142 = vmatprep.subr.bf16.mxu0 0
  %143 = vmatpush1.bf16.msra.mxu0 0
  %144 = vmatprep.subr.bf16.mxu0 0
  %145 = vmatpush1.bf16.msra.mxu0 0
  %146 = vmatprep.subr.bf16.mxu0 0
  %147 = vmatpush1.bf16.msra.mxu0 0
  %148 = vmatprep.subr.bf16.mxu0 0
  %149 = vmatpush1.bf16.msra.mxu0 0
  %150 = vmatprep.subr.bf16.mxu0 0
  %151 = vmatpush1.bf16.msra.mxu0 0
  %152 = vmatprep.subr.bf16.mxu0 0
  %153 = vmatpush1.bf16.msra.mxu0 0
  %154 = vmatprep.subr.bf16.mxu0 0
  %155 = vmatpush1.bf16.msra.mxu0 0
  %156 = vmatprep.subr.bf16.mxu0 0
  %157 = vmatpush1.bf16.msra.mxu0 0
  %158 = vmatprep.subr.bf16.mxu0 0
  %159 = vmatpush1.bf16.msra.mxu0 0
  %160 = vmatprep.mubr.bf16.mxu0 0
  %161 = vmatmul.mubr.bf16.gmra.mrb[0].mxu0 %v119
  %v162 = vpop.f32.mrb[0].mxu0
  %v163 = vadd.f32 %v93, %v162
  %v164 = vpop.f32.mrb[0].mxu0
  %v165 = vpop.f32.mrb[0].mxu0
  %v166 = vadd.f32 %v96, %v165
  %v167 = vpop.f32.mrb[0].mxu0
  %168 = vmatprep.mubr.bf16.mxu0 0
  %169 = vmatmul.mubr.bf16.gmra.mrb[0].mxu0 %v122
  %v170 = vpop.f32.mrb[0].mxu0
  %v171 = vadd.f32 %v101, %v170
  %v172 = vpop.f32.mrb[0].mxu0
  %v173 = vpop.f32.mrb[0].mxu0
  %v174 = vadd.f32 %v104, %v173
  %v175 = vpop.f32.mrb[0].mxu0
  %176 = vdwg.mxu0
  %v177 = vmul.f32 %v163, 0.01
  %v178 = vmul.f32 %v166, 0.01
  %v179 = vmul.f32 %v171, 0.01
  %v180 = vmul.f32 %v174, 0.01
  %v181 = vmax.f32 %v163, %v177
  %v182 = vmax.f32 %v166, %v178
  %v183 = vmax.f32 %v171, %v179
  %v184 = vmax.f32 %v174, %v180
  %v185 = vpack.c.bf16 %v182, %v181
  %v186 = vpack.c.bf16 %v184, %v183
  %v187 = vld [vmem:[%s4] sm:$0xf]
  %v188 = vld [vmem:[%s4 + $0x4] sm:$0xf]
  %v189 = vld [vmem:[%s4 + $0x8] sm:$0xf]
  %v190 = vld [vmem:[%s4 + $0xc] sm:$0xf]
  %v191 = vld [vmem:[%s4 + $0x10] sm:$0xf]
  %v192 = vld [vmem:[%s4 + $0x14] sm:$0xf]
  %v193 = vld [vmem:[%s4 + $0x18] sm:$0xf]
  %v194 = vld [vmem:[%s4 + $0x1c] sm:$0xf]
  %v195 = vld [vmem:[%s4 + $0x20] sm:$0xf]
  %v196 = vld [vmem:[%s4 + $0x24] sm:$0xf]
  %v197 = vld [vmem:[%s4 + $0x28] sm:$0xf]
  %v198 = vld [vmem:[%s4 + $0x2c] sm:$0xf]
  %v199 = vld [vmem:[%s4 + $0x30] sm:$0xf]
  %v200 = vld [vmem:[%s4 + $0x34] sm:$0xf]
  %v201 = vld [vmem:[%s4 + $0x38] sm:$0xf]
  %v202 = vld [vmem:[%s4 + $0x3c] sm:$0xf]
  %v219 = vunpack.c.l.b16 %v187
  %v220 = vunpack.c.l.b16 %v188
  %v221 = vunpack.c.l.b16 %v189
  %v222 = vunpack.c.l.b16 %v190
  %v223 = vunpack.c.l.b16 %v191
  %v224 = vunpack.c.l.b16 %v192
  %v225 = vunpack.c.l.b16 %v193
  %v226 = vunpack.c.l.b16 %v194
  %v227 = vunpack.c.l.b16 %v195
  %v228 = vunpack.c.l.b16 %v196
  %v229 = vunpack.c.l.b16 %v197
  %v230 = vunpack.c.l.b16 %v198
  %v231 = vunpack.c.l.b16 %v199
  %v232 = vunpack.c.l.b16 %v200
  %v233 = vunpack.c.l.b16 %v201
  %v234 = vunpack.c.l.b16 %v202
  %v235 = vpack.c.b16 %v220, %v219
  %v236 = vpack.c.b16 %v222, %v221
  %v237 = vpack.c.b16 %v224, %v223
  %v238 = vpack.c.b16 %v226, %v225
  %v239 = vpack.c.b16 %v228, %v227
  %v240 = vpack.c.b16 %v230, %v229
  %v241 = vpack.c.b16 %v232, %v231
  %v242 = vpack.c.b16 %v234, %v233
  %251 = vmatprep.subr.bf16.mxu0 0
  %252 = vmatpush1.bf16.msra.mxu0 %v235
  %253 = vmatprep.subr.bf16.mxu0 0
  %254 = vmatpush1.bf16.msra.mxu0 %v236
  %255 = vmatprep.subr.bf16.mxu0 0
  %256 = vmatpush1.bf16.msra.mxu0 %v237
  %257 = vmatprep.subr.bf16.mxu0 0
  %258 = vmatpush1.bf16.msra.mxu0 %v238
  %259 = vmatprep.subr.bf16.mxu0 0
  %260 = vmatpush1.bf16.msra.mxu0 %v239
  %261 = vmatprep.subr.bf16.mxu0 0
  %262 = vmatpush1.bf16.msra.mxu0 %v240
  %263 = vmatprep.subr.bf16.mxu0 0
  %264 = vmatpush1.bf16.msra.mxu0 %v241
  %265 = vmatprep.subr.bf16.mxu0 0
  %266 = vmatpush1.bf16.msra.mxu0 %v242
  %267 = vmatprep.subr.bf16.mxu0 0
  %268 = vmatpush1.bf16.msra.mxu0 0
  %269 = vmatprep.subr.bf16.mxu0 0
  %270 = vmatpush1.bf16.msra.mxu0 0
  %271 = vmatprep.subr.bf16.mxu0 0
  %272 = vmatpush1.bf16.msra.mxu0 0
  %273 = vmatprep.subr.bf16.mxu0 0
  %274 = vmatpush1.bf16.msra.mxu0 0
  %275 = vmatprep.subr.bf16.mxu0 0
  %276 = vmatpush1.bf16.msra.mxu0 0
  %277 = vmatprep.subr.bf16.mxu0 0
  %278 = vmatpush1.bf16.msra.mxu0 0
  %279 = vmatprep.subr.bf16.mxu0 0
  %280 = vmatpush1.bf16.msra.mxu0 0
  %281 = vmatprep.subr.bf16.mxu0 0
  %282 = vmatpush1.bf16.msra.mxu0 0
  %283 = vmatprep.mubr.bf16.mxu0 0
  %284 = vmatmul.mubr.bf16.gmra.mrb[0].mxu0 %v185
  %v285 = vpop.f32.mrb[0].mxu0
  %v286 = vadd.f32 0.0, %v285
  %v287 = vpop.f32.mrb[0].mxu0
  %v288 = vpop.f32.mrb[0].mxu0
  %v289 = vadd.f32 0.0, %v288
  %v290 = vpop.f32.mrb[0].mxu0
  %291 = vmatprep.mubr.bf16.mxu0 0
  %292 = vmatmul.mubr.bf16.gmra.mrb[0].mxu0 %v186
  %v293 = vpop.f32.mrb[0].mxu0
  %v294 = vadd.f32 0.0, %v293
  %v295 = vpop.f32.mrb[0].mxu0
  %v296 = vpop.f32.mrb[0].mxu0
  %v297 = vadd.f32 0.0, %v296
  %v298 = vpop.f32.mrb[0].mxu0
  %299 = vdwg.mxu0
  %v300 = vmul.f32 %v286, 0.01
  %v301 = vmul.f32 %v289, 0.01
  %v302 = vmul.f32 %v294, 0.01
  %v303 = vmul.f32 %v297, 0.01
  %v304 = vmax.f32 %v286, %v300
  %v305 = vmax.f32 %v289, %v301
  %v306 = vmax.f32 %v294, %v302
  %v307 = vmax.f32 %v297, %v303
  %v308 = vpack.c.bf16 %v305, %v304
  %v309 = vpack.c.bf16 %v307, %v306
  %v310 = vld [vmem:[%s5] sm:$0xf]
  %v311 = vld [vmem:[%s5 + $0x4] sm:$0xf]
  %v312 = vld [vmem:[%s5 + $0x8] sm:$0xf]
  %v313 = vld [vmem:[%s5 + $0xc] sm:$0xf]
  %v314 = vld [vmem:[%s5 + $0x10] sm:$0xf]
  %v315 = vld [vmem:[%s5 + $0x14] sm:$0xf]
  %v316 = vld [vmem:[%s5 + $0x18] sm:$0xf]
  %v317 = vld [vmem:[%s5 + $0x1c] sm:$0xf]
  %v318 = vld [vmem:[%s5 + $0x20] sm:$0xf]
  %v319 = vld [vmem:[%s5 + $0x24] sm:$0xf]
  %v320 = vld [vmem:[%s5 + $0x28] sm:$0xf]
  %v321 = vld [vmem:[%s5 + $0x2c] sm:$0xf]
  %v322 = vld [vmem:[%s5 + $0x30] sm:$0xf]
  %v323 = vld [vmem:[%s5 + $0x34] sm:$0xf]
  %v324 = vld [vmem:[%s5 + $0x38] sm:$0xf]
  %v325 = vld [vmem:[%s5 + $0x3c] sm:$0xf]
  %v342 = vunpack.c.l.b16 %v310
  %v343 = vunpack.c.l.b16 %v311
  %v344 = vunpack.c.l.b16 %v312
  %v345 = vunpack.c.l.b16 %v313
  %v346 = vunpack.c.l.b16 %v314
  %v347 = vunpack.c.l.b16 %v315
  %v348 = vunpack.c.l.b16 %v316
  %v349 = vunpack.c.l.b16 %v317
  %v350 = vunpack.c.l.b16 %v318
  %v351 = vunpack.c.l.b16 %v319
  %v352 = vunpack.c.l.b16 %v320
  %v353 = vunpack.c.l.b16 %v321
  %v354 = vunpack.c.l.b16 %v322
  %v355 = vunpack.c.l.b16 %v323
  %v356 = vunpack.c.l.b16 %v324
  %v357 = vunpack.c.l.b16 %v325
  %v358 = vpack.c.b16 %v343, %v342
  %v359 = vpack.c.b16 %v345, %v344
  %v360 = vpack.c.b16 %v347, %v346
  %v361 = vpack.c.b16 %v349, %v348
  %v362 = vpack.c.b16 %v351, %v350
  %v363 = vpack.c.b16 %v353, %v352
  %v364 = vpack.c.b16 %v355, %v354
  %v365 = vpack.c.b16 %v357, %v356
  %374 = vmatprep.subr.bf16.mxu0 0
  %375 = vmatpush1.bf16.msra.mxu0 %v358
  %376 = vmatprep.subr.bf16.mxu0 0
  %377 = vmatpush1.bf16.msra.mxu0 %v359
  %378 = vmatprep.subr.bf16.mxu0 0
  %379 = vmatpush1.bf16.msra.mxu0 %v360
  %380 = vmatprep.subr.bf16.mxu0 0
  %381 = vmatpush1.bf16.msra.mxu0 %v361
  %382 = vmatprep.subr.bf16.mxu0 0
  %383 = vmatpush1.bf16.msra.mxu0 %v362
  %384 = vmatprep.subr.bf16.mxu0 0
  %385 = vmatpush1.bf16.msra.mxu0 %v363
  %386 = vmatprep.subr.bf16.mxu0 0
  %387 = vmatpush1.bf16.msra.mxu0 %v364
  %388 = vmatprep.subr.bf16.mxu0 0
  %389 = vmatpush1.bf16.msra.mxu0 %v365
  %390 = vmatprep.subr.bf16.mxu0 0
  %391 = vmatpush1.bf16.msra.mxu0 0
  %392 = vmatprep.subr.bf16.mxu0 0
  %393 = vmatpush1.bf16.msra.mxu0 0
  %394 = vmatprep.subr.bf16.mxu0 0
  %395 = vmatpush1.bf16.msra.mxu0 0
  %396 = vmatprep.subr.bf16.mxu0 0
  %397 = vmatpush1.bf16.msra.mxu0 0
  %398 = vmatprep.subr.bf16.mxu0 0
  %399 = vmatpush1.bf16.msra.mxu0 0
  %400 = vmatprep.subr.bf16.mxu0 0
  %401 = vmatpush1.bf16.msra.mxu0 0
  %402 = vmatprep.subr.bf16.mxu0 0
  %403 = vmatpush1.bf16.msra.mxu0 0
  %404 = vmatprep.subr.bf16.mxu0 0
  %405 = vmatpush1.bf16.msra.mxu0 0
  %406 = vmatprep.mubr.bf16.mxu0 0
  %407 = vmatmul.mubr.bf16.gmra.mrb[0].mxu0 %v308
  %v408 = vpop.f32.mrb[0].mxu0
  %v409 = vadd.f32 0.0, %v408
  %v410 = vpop.f32.mrb[0].mxu0
  %v411 = vpop.f32.mrb[0].mxu0
  %v412 = vadd.f32 0.0, %v411
  %v413 = vpop.f32.mrb[0].mxu0
  %414 = vmatprep.mubr.bf16.mxu0 0
  %415 = vmatmul.mubr.bf16.gmra.mrb[0].mxu0 %v309
  %v416 = vpop.f32.mrb[0].mxu0
  %v417 = vadd.f32 0.0, %v416
  %v418 = vpop.f32.mrb[0].mxu0
  %v419 = vpop.f32.mrb[0].mxu0
  %v420 = vadd.f32 0.0, %v419
  %v421 = vpop.f32.mrb[0].mxu0
  %422 = vdwg.mxu0
  %v423 = vmul.f32 %v409, 0.01
  %v424 = vmul.f32 %v412, 0.01
  %v425 = vmul.f32 %v417, 0.01
  %v426 = vmul.f32 %v420, 0.01
  %v427 = vmax.f32 %v409, %v423
  %v428 = vmax.f32 %v412, %v424
  %v429 = vmax.f32 %v417, %v425
  %v430 = vmax.f32 %v420, %v426
  %v431 = vpack.c.bf16 %v428, %v427
  %v432 = vpack.c.bf16 %v430, %v429
  %v433 = vld [vmem:[%s6] sm:$0xf]
  %v434 = vld [vmem:[%s6 + $0x4] sm:$0xf]
  %v435 = vld [vmem:[%s6 + $0x8] sm:$0xf]
  %v436 = vld [vmem:[%s6 + $0xc] sm:$0xf]
  %v437 = vld [vmem:[%s6 + $0x10] sm:$0xf]
  %v438 = vld [vmem:[%s6 + $0x14] sm:$0xf]
  %v439 = vld [vmem:[%s6 + $0x18] sm:$0xf]
  %v440 = vld [vmem:[%s6 + $0x1c] sm:$0xf]
  %v441 = vld [vmem:[%s6 + $0x20] sm:$0xf]
  %v442 = vld [vmem:[%s6 + $0x24] sm:$0xf]
  %v443 = vld [vmem:[%s6 + $0x28] sm:$0xf]
  %v444 = vld [vmem:[%s6 + $0x2c] sm:$0xf]
  %v445 = vld [vmem:[%s6 + $0x30] sm:$0xf]
  %v446 = vld [vmem:[%s6 + $0x34] sm:$0xf]
  %v447 = vld [vmem:[%s6 + $0x38] sm:$0xf]
  %v448 = vld [vmem:[%s6 + $0x3c] sm:$0xf]
  %v465 = vunpack.c.l.b16 %v433
  %v466 = vunpack.c.l.b16 %v434
  %v467 = vunpack.c.l.b16 %v435
  %v468 = vunpack.c.l.b16 %v436
  %v469 = vunpack.c.l.b16 %v437
  %v470 = vunpack.c.l.b16 %v438
  %v471 = vunpack.c.l.b16 %v439
  %v472 = vunpack.c.l.b16 %v440
  %v473 = vunpack.c.l.b16 %v441
  %v474 = vunpack.c.l.b16 %v442
  %v475 = vunpack.c.l.b16 %v443
  %v476 = vunpack.c.l.b16 %v444
  %v477 = vunpack.c.l.b16 %v445
  %v478 = vunpack.c.l.b16 %v446
  %v479 = vunpack.c.l.b16 %v447
  %v480 = vunpack.c.l.b16 %v448
  %v481 = vpack.c.b16 %v466, %v465
  %v482 = vpack.c.b16 %v468, %v467
  %v483 = vpack.c.b16 %v470, %v469
  %v484 = vpack.c.b16 %v472, %v471
  %v485 = vpack.c.b16 %v474, %v473
  %v486 = vpack.c.b16 %v476, %v475
  %v487 = vpack.c.b16 %v478, %v477
  %v488 = vpack.c.b16 %v480, %v479
  %497 = vmatprep.subr.bf16.mxu0 0
  %498 = vmatpush1.bf16.msra.mxu0 %v481
  %499 = vmatprep.subr.bf16.mxu0 0
  %500 = vmatpush1.bf16.msra.mxu0 %v482
  %501 = vmatprep.subr.bf16.mxu0 0
  %502 = vmatpush1.bf16.msra.mxu0 %v483
  %503 = vmatprep.subr.bf16.mxu0 0
  %504 = vmatpush1.bf16.msra.mxu0 %v484
  %505 = vmatprep.subr.bf16.mxu0 0
  %506 = vmatpush1.bf16.msra.mxu0 %v485
  %507 = vmatprep.subr.bf16.mxu0 0
  %508 = vmatpush1.bf16.msra.mxu0 %v486
  %509 = vmatprep.subr.bf16.mxu0 0
  %510 = vmatpush1.bf16.msra.mxu0 %v487
  %511 = vmatprep.subr.bf16.mxu0 0
  %512 = vmatpush1.bf16.msra.mxu0 %v488
  %513 = vmatprep.subr.bf16.mxu0 0
  %514 = vmatpush1.bf16.msra.mxu0 0
  %515 = vmatprep.subr.bf16.mxu0 0
  %516 = vmatpush1.bf16.msra.mxu0 0
  %517 = vmatprep.subr.bf16.mxu0 0
  %518 = vmatpush1.bf16.msra.mxu0 0
  %519 = vmatprep.subr.bf16.mxu0 0
  %520 = vmatpush1.bf16.msra.mxu0 0
  %521 = vmatprep.subr.bf16.mxu0 0
  %522 = vmatpush1.bf16.msra.mxu0 0
  %523 = vmatprep.subr.bf16.mxu0 0
  %524 = vmatpush1.bf16.msra.mxu0 0
  %525 = vmatprep.subr.bf16.mxu0 0
  %526 = vmatpush1.bf16.msra.mxu0 0
  %527 = vmatprep.subr.bf16.mxu0 0
  %528 = vmatpush1.bf16.msra.mxu0 0
  %529 = vmatprep.mubr.bf16.mxu0 0
  %530 = vmatmul.mubr.bf16.gmra.mrb[0].mxu0 %v431
  %v531 = vpop.f32.mrb[0].mxu0
  %v532 = vadd.f32 0.0, %v531
  %v533 = vpop.f32.mrb[0].mxu0
  %v534 = vpop.f32.mrb[0].mxu0
  %v535 = vadd.f32 0.0, %v534
  %v536 = vpop.f32.mrb[0].mxu0
  %537 = vmatprep.mubr.bf16.mxu0 0
  %538 = vmatmul.mubr.bf16.gmra.mrb[0].mxu0 %v432
  %v539 = vpop.f32.mrb[0].mxu0
  %v540 = vadd.f32 0.0, %v539
  %v541 = vpop.f32.mrb[0].mxu0
  %v542 = vpop.f32.mrb[0].mxu0
  %v543 = vadd.f32 0.0, %v542
  %v544 = vpop.f32.mrb[0].mxu0
  %545 = vdwg.mxu0
  %vm546 = vcmask 195584
  %v547 = vsel %vm546, %v532, 0.0
  %v548 = vsel %vm546, %v535, 0.0
  %v549 = vadd.f32 %v547, %v548
  %v550 = vsel %vm546, %v540, 0.0
  %v551 = vadd.f32 %v549, %v550
  %v552 = vsel %vm546, %v543, 0.0
  %v553 = vadd.f32 %v551, %v552
  %v554 = vmul.f32 %v553, 0.25
  %v555 = vsub.f32 %v532, %v554
  %v556 = vsub.f32 %v535, %v554
  %v557 = vsub.f32 %v540, %v554
  %v558 = vsub.f32 %v543, %v554
  %v559 = vmul.f32 %v555, %v555
  %v560 = vmul.f32 %v556, %v556
  %v561 = vmul.f32 %v557, %v557
  %v562 = vmul.f32 %v558, %v558
  %v563 = vsel %vm546, %v559, 0.0
  %v564 = vsel %vm546, %v560, 0.0
  %v565 = vadd.f32 %v563, %v564
  %v566 = vsel %vm546, %v561, 0.0
  %v567 = vadd.f32 %v565, %v566
  %v568 = vsel %vm546, %v562, 0.0
  %v569 = vadd.f32 %v567, %v568
  %v570 = vmul.f32 %v569, 0.33333334
  %571 = vst.msk [vmem:[%s7] sm:$0xff] %vm546, %v554
  %s572 = scalar_lea.vmem %s7, 8
  %573 = vst.msk [vmem:[%s572] sm:$0xff] %vm546, %v570
  // Predicated region
  $region30: #{model_forward.1} parent=0 // pred_check
    _
  $region31: #{model_forward.1} parent=0 // pred_check_branch
    %575 = sbr.rel (0) target = $region33
  $region32: #{model_forward.1} parent=0 // pred_region
    _
  $region33: #{model_forward.1} parent=0 // pred_fallthru
    _
  // Predicated region
  $region34: #{model_forward.1} parent=0 // pred_check
    _
  $region35: #{model_forward.1} parent=0 // pred_check_branch
    %577 = sbr.rel (0) target = $region37
  $region36: #{model_forward.1} parent=0 // pred_region
    _
  $region37: #{model_forward.1} parent=0 // pred_fallthru
    _

</llo_original>
